<compile_context>
chip_gen: v5e
topology: v5e:2x2
jax: 0.10.0
libtpu: 0.0.40
codegen_flags: <defaults>
</compile_context>

<pallas_src>
import jax
import jax.numpy as jnp
from jax.experimental import pallas as pl
from jax.experimental.pallas import tpu as pltpu


def _round_up(x, m):
    return ((x + m - 1) // m) * m


def size_embedder_kernel(s_ref, freqs_ref, w1c_ref, w1s_ref, b1_ref,
                         w2_ref, b2_ref, o_ref):
    # s_ref: (TN, 1) f32 scalar sizes for this tile of rows.
    s = s_ref[...]                                    # (TN, 1)
    args = s * freqs_ref[...]                         # (TN, half) lane-broadcast

    # Sinusoidal embedding folded into the first Linear:
    #   [cos(args) | sin(args)] @ W1 == cos(args) @ W1_cos + sin(args) @ W1_sin
    h = (jnp.dot(jnp.cos(args), w1c_ref[...], preferred_element_type=jnp.float32)
         + jnp.dot(jnp.sin(args), w1s_ref[...], preferred_element_type=jnp.float32)
         + b1_ref[...])                               # (TN, H)

    # SiLU (sigmoid goes to the EUP slot; mul is VPU).
    h = h * jax.nn.sigmoid(h)

    # Second Linear.
    out = jnp.dot(h, w2_ref[...], preferred_element_type=jnp.float32) + b2_ref[...]
    o_ref[...] = out.astype(o_ref.dtype)


def size_embedder(s, bs, w1, b1, w2, b2, frequency_embedding_size=256,
                  max_period=10000.0):
    """s: (B,) or (B, dims); w1: (F, H); b1: (H,); w2: (H, H); b2: (H,).
    Returns (bs, dims * H), matching SizeEmbedder.forward."""
    if s.ndim == 1:
        s = s[:, None]
    assert s.ndim == 2
    if s.shape[0] != bs:
        assert bs % s.shape[0] == 0
        s = jnp.tile(s, (bs // s.shape[0], 1))
    b, dims = s.shape
    F = int(frequency_embedding_size)
    half = F // 2
    H = w2.shape[1]
    out_dtype = w2.dtype

    # Flatten "(b d)" and pad rows to a sublane-aligned tile size.
    N = b * dims
    s_flat = s.reshape(N, 1).astype(jnp.float32)
    TN = min(256, _round_up(N, 8))
    N_pad = _round_up(N, TN)
    if N_pad != N:
        s_flat = jnp.pad(s_flat, ((0, N_pad - N), (0, 0)))
    grid = (N_pad // TN,)

    # Frequencies: tiny (1, half) table, computed once in the wrapper.
    freqs = jnp.exp(
        -jnp.log(jnp.float32(max_period))
        * jnp.arange(half, dtype=jnp.float32) / jnp.float32(half)
    ).reshape(1, half)

    # Split W1 into cos / sin halves (removes the lane-axis concat in-kernel).
    # If F were odd, PyTorch appends a zero column whose W1 row is never used,
    # so taking exactly rows [:half] and [half:2*half] stays correct.
    w1c = w1[:half].astype(jnp.float32)
    w1s = w1[half:2 * half].astype(jnp.float32)
    w2f = w2.astype(jnp.float32)
    b1_2d = b1.reshape(1, H).astype(jnp.float32)
    b2_2d = b2.reshape(1, H).astype(jnp.float32)

    resident = lambda i: (0, 0)   # weights/biases: same block every grid step
    out_pad = pl.pallas_call(
        size_embedder_kernel,
        out_shape=jax.ShapeDtypeStruct((N_pad, H), out_dtype),
        grid=grid,
        in_specs=[
            pl.BlockSpec((TN, 1), lambda i: (i, 0)),      # s rows (pipelined)
            pl.BlockSpec((1, half), resident),            # freqs
            pl.BlockSpec((half, H), resident),            # W1 cos half
            pl.BlockSpec((half, H), resident),            # W1 sin half
            pl.BlockSpec((1, H), resident),               # b1
            pl.BlockSpec((H, H), resident),               # W2
            pl.BlockSpec((1, H), resident),               # b2
        ],
        out_specs=pl.BlockSpec((TN, H), lambda i: (i, 0)),
        compiler_params=pltpu.CompilerParams(
            dimension_semantics=("parallel",)),
    )(s_flat, freqs, w1c, w1s, b1_2d, w2f, b2_2d)

    # "(b d) h -> b (d h)" rearrange is pure layout plumbing, done in wrapper.
    return out_pad[:N].reshape(b, dims * H)


def size_embedder_ref(s, bs, w1, b1, w2, b2, frequency_embedding_size=256,
                      max_period=10000.0):
    """Pure-JAX reference mirroring the PyTorch SizeEmbedder.forward."""
    if s.ndim == 1:
        s = s[:, None]
    if s.shape[0] != bs:
        s = jnp.tile(s, (bs // s.shape[0], 1))
    b, dims = s.shape
    H = w2.shape[1]
    half = frequency_embedding_size // 2
    sf = s.reshape(-1).astype(jnp.float32)
    freqs = jnp.exp(-jnp.log(jnp.float32(max_period))
                    * jnp.arange(half, dtype=jnp.float32) / jnp.float32(half))
    args = sf[:, None] * freqs[None]
    emb = jnp.concatenate([jnp.cos(args), jnp.sin(args)], axis=-1)
    h = emb @ w1 + b1
    h = h * jax.nn.sigmoid(h)
    out = h @ w2 + b2
    return out.reshape(b, dims * H)


if __name__ == "__main__":
    # Small shapes consistent with SizeEmbedder(hidden_size=32,
    # frequency_embedding_size=256): bs=2, dims=2 (e.g. (height, width) pair).
    bs, dims = 2, 2
    F, H = 256, 32

    key = jax.random.PRNGKey(0)
    ks, k1, k2, k3, k4 = jax.random.split(key, 5)

    # Sizes (e.g. image heights/widths), positive floats.
    s = jax.random.uniform(ks, (bs, dims), jnp.float32, 64.0, 1024.0)

    # PyTorch-like uniform(-1/sqrt(fan_in), 1/sqrt(fan_in)) init, (in, out) layout.
    bound1 = 1.0 / (F ** 0.5)
    bound2 = 1.0 / (H ** 0.5)
    w1 = jax.random.uniform(k1, (F, H), jnp.float32, -bound1, bound1)
    b1 = jax.random.uniform(k2, (H,), jnp.float32, -bound1, bound1)
    w2 = jax.random.uniform(k3, (H, H), jnp.float32, -bound2, bound2)
    b2 = jax.random.uniform(k4, (H,), jnp.float32, -bound2, bound2)

    out = size_embedder(s, bs, w1, b1, w2, b2, frequency_embedding_size=F)
    out = jax.block_until_ready(out)

    ref = size_embedder_ref(s, bs, w1, b1, w2, b2, frequency_embedding_size=F)
    assert out.shape == (bs, dims * H), out.shape
    assert jnp.allclose(out, ref, atol=1e-4, rtol=1e-4), "mismatch vs reference"

    print("KERNEL_OK")
</pallas_src>

<mosaic_0001>
module attributes {stable_mosaic.version = 11 : i64} {
  func.func @size_embedder_kernel(%arg0: i32, %arg1: memref<8x1xf32, #tpu.memory_space<vmem>>, %arg2: memref<1x128xf32, #tpu.memory_space<vmem>>, %arg3: memref<128x32xf32, #tpu.memory_space<vmem>>, %arg4: memref<128x32xf32, #tpu.memory_space<vmem>>, %arg5: memref<1x32xf32, #tpu.memory_space<vmem>>, %arg6: memref<32x32xf32, #tpu.memory_space<vmem>>, %arg7: memref<1x32xf32, #tpu.memory_space<vmem>>, %arg8: memref<8x32xf32, #tpu.memory_space<vmem>>) attributes {dimension_semantics = [#tpu.dimension_semantics<parallel>], iteration_bounds = array<i64: 1>, scalar_prefetch = 0 : i64, scratch_operands = 0 : i64, tpu.core_type = #tpu.core_type<tc>, window_params = [{transform_indices = @transform_0, window_bounds = array<i64: 8, 1>}, {pipeline_mode = #tpu.pipeline_mode<synchronous>, transform_indices = @transform_1, window_bounds = array<i64: 1, 128>}, {pipeline_mode = #tpu.pipeline_mode<synchronous>, transform_indices = @transform_2, window_bounds = array<i64: 128, 32>}, {pipeline_mode = #tpu.pipeline_mode<synchronous>, transform_indices = @transform_3, window_bounds = array<i64: 128, 32>}, {pipeline_mode = #tpu.pipeline_mode<synchronous>, transform_indices = @transform_4, window_bounds = array<i64: 1, 32>}, {pipeline_mode = #tpu.pipeline_mode<synchronous>, transform_indices = @transform_5, window_bounds = array<i64: 32, 32>}, {pipeline_mode = #tpu.pipeline_mode<synchronous>, transform_indices = @transform_6, window_bounds = array<i64: 1, 32>}, {transform_indices = @transform_7, window_bounds = array<i64: 8, 32>}]} {
    %c0 = arith.constant 0 : index
    %c0_0 = arith.constant 0 : index
    %0 = vector.load %arg1[%c0, %c0_0] : memref<8x1xf32, #tpu.memory_space<vmem>>, vector<8x1xf32>
    %c0_1 = arith.constant 0 : index
    %c0_2 = arith.constant 0 : index
    %1 = vector.load %arg2[%c0_1, %c0_2] : memref<1x128xf32, #tpu.memory_space<vmem>>, vector<1x128xf32>
    %2 = vector.broadcast %0 : vector<8x1xf32> to vector<8x128xf32>
    %3 = vector.broadcast %1 : vector<1x128xf32> to vector<8x128xf32>
    %4 = arith.mulf %2, %3 : vector<8x128xf32>
    %5 = math.cos %4 : vector<8x128xf32>
    %c0_3 = arith.constant 0 : index
    %c0_4 = arith.constant 0 : index
    %6 = vector.load %arg3[%c0_3, %c0_4] : memref<128x32xf32, #tpu.memory_space<vmem>>, vector<128x32xf32>
    %cst = arith.constant dense<0.000000e+00> : vector<8x32xf32>
    %7 = tpu.matmul %5, %6, %cst {dimension_numbers = #tpu.dot_dimension_numbers<[1], [0], [0], [1], [0, 0, 1, 1], [], []>} : vector<8x128xf32>, vector<128x32xf32>, vector<8x32xf32> -> vector<8x32xf32>
    %8 = math.sin %4 : vector<8x128xf32>
    %c0_5 = arith.constant 0 : index
    %c0_6 = arith.constant 0 : index
    %9 = vector.load %arg4[%c0_5, %c0_6] : memref<128x32xf32, #tpu.memory_space<vmem>>, vector<128x32xf32>
    %cst_7 = arith.constant dense<0.000000e+00> : vector<8x32xf32>
    %10 = tpu.matmul %8, %9, %cst_7 {dimension_numbers = #tpu.dot_dimension_numbers<[1], [0], [0], [1], [0, 0, 1, 1], [], []>} : vector<8x128xf32>, vector<128x32xf32>, vector<8x32xf32> -> vector<8x32xf32>
    %11 = arith.addf %7, %10 : vector<8x32xf32>
    %c0_8 = arith.constant 0 : index
    %c0_9 = arith.constant 0 : index
    %12 = vector.load %arg5[%c0_8, %c0_9] : memref<1x32xf32, #tpu.memory_space<vmem>>, vector<1x32xf32>
    %13 = vector.broadcast %12 : vector<1x32xf32> to vector<8x32xf32>
    %14 = arith.addf %11, %13 : vector<8x32xf32>
    %15 = arith.negf %14 : vector<8x32xf32>
    %16 = math.exp %15 : vector<8x32xf32>
    %cst_10 = arith.constant 1.000000e+00 : f32
    %17 = vector.broadcast %cst_10 : f32 to vector<8x32xf32>
    %18 = arith.addf %17, %16 : vector<8x32xf32>
    %19 = arith.divf %17, %18 : vector<8x32xf32>
    %20 = arith.mulf %14, %19 : vector<8x32xf32>
    %c0_11 = arith.constant 0 : index
    %c0_12 = arith.constant 0 : index
    %21 = vector.load %arg6[%c0_11, %c0_12] : memref<32x32xf32, #tpu.memory_space<vmem>>, vector<32x32xf32>
    %cst_13 = arith.constant dense<0.000000e+00> : vector<8x32xf32>
    %22 = tpu.matmul %20, %21, %cst_13 {dimension_numbers = #tpu.dot_dimension_numbers<[1], [0], [0], [1], [0, 0, 1, 1], [], []>} : vector<8x32xf32>, vector<32x32xf32>, vector<8x32xf32> -> vector<8x32xf32>
    %c0_14 = arith.constant 0 : index
    %c0_15 = arith.constant 0 : index
    %23 = vector.load %arg7[%c0_14, %c0_15] : memref<1x32xf32, #tpu.memory_space<vmem>>, vector<1x32xf32>
    %24 = vector.broadcast %23 : vector<1x32xf32> to vector<8x32xf32>
    %25 = arith.addf %22, %24 : vector<8x32xf32>
    %c0_16 = arith.constant 0 : index
    %c0_17 = arith.constant 0 : index
    %26 = vector.load %arg8[%c0_16, %c0_17] : memref<8x32xf32, #tpu.memory_space<vmem>>, vector<8x32xf32>
    tpu.vector_store %arg8[%c0_16, %c0_17], %25 {strides = array<i32>} : memref<8x32xf32, #tpu.memory_space<vmem>>, vector<8x32xf32>,
    return
  }
  func.func @transform_0(%arg0: i32) -> (i32, i32) {
    %c0_i32 = arith.constant 0 : i32
    %c0_i32_0 = arith.constant 0 : i32
    return %arg0, %c0_i32 : i32, i32
  }
  func.func @transform_1(%arg0: i32) -> (i32, i32) {
    %c0_i32 = arith.constant 0 : i32
    %c0_i32_0 = arith.constant 0 : i32
    %c0_i32_1 = arith.constant 0 : i32
    return %c0_i32, %c0_i32_0 : i32, i32
  }
  func.func @transform_2(%arg0: i32) -> (i32, i32) {
    %c0_i32 = arith.constant 0 : i32
    %c0_i32_0 = arith.constant 0 : i32
    %c0_i32_1 = arith.constant 0 : i32
    return %c0_i32, %c0_i32_0 : i32, i32
  }
  func.func @transform_3(%arg0: i32) -> (i32, i32) {
    %c0_i32 = arith.constant 0 : i32
    %c0_i32_0 = arith.constant 0 : i32
    %c0_i32_1 = arith.constant 0 : i32
    return %c0_i32, %c0_i32_0 : i32, i32
  }
  func.func @transform_4(%arg0: i32) -> (i32, i32) {
    %c0_i32 = arith.constant 0 : i32
    %c0_i32_0 = arith.constant 0 : i32
    %c0_i32_1 = arith.constant 0 : i32
    return %c0_i32, %c0_i32_0 : i32, i32
  }
  func.func @transform_5(%arg0: i32) -> (i32, i32) {
    %c0_i32 = arith.constant 0 : i32
    %c0_i32_0 = arith.constant 0 : i32
    %c0_i32_1 = arith.constant 0 : i32
    return %c0_i32, %c0_i32_0 : i32, i32
  }
  func.func @transform_6(%arg0: i32) -> (i32, i32) {
    %c0_i32 = arith.constant 0 : i32
    %c0_i32_0 = arith.constant 0 : i32
    %c0_i32_1 = arith.constant 0 : i32
    return %c0_i32, %c0_i32_0 : i32, i32
  }
  func.func @transform_7(%arg0: i32) -> (i32, i32) {
    %c0_i32 = arith.constant 0 : i32
    %c0_i32_0 = arith.constant 0 : i32
    return %arg0, %c0_i32 : i32, i32
  }
}

</mosaic_0001>

<llo_original>
// kernel: tpu_custom_call.1
$region0: #{tpu_custom_call.1}
  #allocation0 [shape = 'u32[]', space=smem, size = 0x4, offset = 0x4, fixed_abs, tag = 'smem constant byte address 0x4 - core index']
  #allocation1 [shape = 'u32[72,128]{1,0:T(1,128)}', space=vmem, size = 0x9000, scoped, tag = 'internal scratch']
  %s0 = inlined_call_operand.vmem [shape: f32[8,1], index: 0, kind: input, shape index: {}]
  %s1 = inlined_call_operand.vmem [shape: f32[1,128], index: 1, kind: input, shape index: {}]
  %s2 = inlined_call_operand.vmem [shape: f32[128,32], index: 2, kind: input, shape index: {}]
  %s3 = inlined_call_operand.vmem [shape: f32[128,32], index: 3, kind: input, shape index: {}]
  %s4 = inlined_call_operand.vmem [shape: f32[1,32], index: 4, kind: input, shape index: {}]
  %s5 = inlined_call_operand.vmem [shape: f32[32,32], index: 5, kind: input, shape index: {}]
  %s6 = inlined_call_operand.vmem [shape: f32[1,32], index: 6, kind: input, shape index: {}]
  %s7 = inlined_call_operand.hbm [shape: f32[8,32], index: 7, kind: output, shape index: {}]
  %s8 = sld [smem:[#allocation0]]
  $region38: #{tpu_custom_call.1} parent=0
    _
  %s10 = ssub.s32 1, %s8
  %s11 = scalar_select 0, %s10, %s8
  $region1: #{tpu_custom_call.1} parent=0
    #allocation2 [shape = 'u8[4096]{0}', space=vmem, size = 0x1000, scoped, tag = 'output window, operand 0, single buffered']
    #allocation3 [shape = 's32[1]{0}', space=sflag, size = 0x4, scoped, tag = 'scoped memory for tpu_custom_call.1']
    %12 = vsyncpa [#allocation3], 0
    // Predicated region
    $region2: #{tpu_custom_call.1} parent=1 // pred_check
      _
    $region3: #{tpu_custom_call.1} parent=1 // pred_check_branch
      %14 = sbr.rel (0) target = $region5
    $region4: #{tpu_custom_call.1} parent=1 // pred_region
      _
    $region5: #{tpu_custom_call.1} parent=1 // pred_fallthru
      _
    // Predicated region
    $region6: #{tpu_custom_call.1} parent=1 // pred_check
      _
    $region7: #{tpu_custom_call.1} parent=1 // pred_check_branch
      %16 = sbr.rel (0) target = $region9
    $region8: #{tpu_custom_call.1} parent=1 // pred_region
      _
    $region9: #{tpu_custom_call.1} parent=1 // pred_fallthru
      _
    // Predicated region
    $region10: #{tpu_custom_call.1} parent=1 // pred_check
      _
    $region11: #{tpu_custom_call.1} parent=1 // pred_check_branch
      %18 = sbr.rel (0) target = $region13
    $region12: #{tpu_custom_call.1} parent=1 // pred_region
      _
    $region13: #{tpu_custom_call.1} parent=1 // pred_fallthru
      _
    // Predicated region
    $region14: #{tpu_custom_call.1} parent=1 // pred_check
      _
    $region15: #{tpu_custom_call.1} parent=1 // pred_check_branch
      %20 = sbr.rel (0) target = $region17
    $region16: #{tpu_custom_call.1} parent=1 // pred_region
      _
    $region17: #{tpu_custom_call.1} parent=1 // pred_fallthru
      _
    // Predicated region
    $region18: #{tpu_custom_call.1} parent=1 // pred_check
      _
    $region19: #{tpu_custom_call.1} parent=1 // pred_check_branch
      %22 = sbr.rel (0) target = $region21
    $region20: #{tpu_custom_call.1} parent=1 // pred_region
      _
    $region21: #{tpu_custom_call.1} parent=1 // pred_fallthru
      _
    // Predicated region
    $region22: #{tpu_custom_call.1} parent=1 // pred_check
      _
    $region23: #{tpu_custom_call.1} parent=1 // pred_check_branch
      %24 = sbr.rel (0) target = $region25
    $region24: #{tpu_custom_call.1} parent=1 // pred_region
      _
    $region25: #{tpu_custom_call.1} parent=1 // pred_fallthru
      _
    // Predicated region
    $region26: #{tpu_custom_call.1} parent=1 // pred_check
      _
    $region27: #{tpu_custom_call.1} parent=1 // pred_check_branch
      %26 = sbr.rel (0) target = $region29
    $region28: #{tpu_custom_call.1} parent=1 // pred_region
      _
    $region29: #{tpu_custom_call.1} parent=1 // pred_fallthru
      _
    %v27 = vld [vmem:[%s0] sm:$0xff]
    %v28 = vld [vmem:[%s1] sm:$0x1]
    %30 = vset.pattern.permute.xlu0 0
    %31 = vperm.xlu0 %30, %v27
    %v32 = vpop.permute.xlu0 %31
    %v35 = vperm.slane %v28, 0
    %v37 = vmul.f32 %v32, %v35
    %v38 = vand.u32 2147483647, %v37
    %vm39 = vcmp.le.f32.partialorder %v38, 0.7853982
    %vm40 = vcmp.lt.s32.totalorder %v37, 0
    %v41 = vand.u32 %v37, 2139095040
    %v42 = vshrl.u32 %v41, 23
    %v43 = vsub.s32 %v42, 127
    %v44 = vand.u32 2147483647, %v37
    %v45 = vand.u32 %v44, 8388607
    %v46 = vor.u32 %v45, 8388608
    %v47 = vsub.s32 0, %v46
    %v48 = vadd.s32 %v43, 1
    %vm49 = vcmp.gt.s32.totalorder %v48, 0
    %v50 = vsel %vm49, %v48, 0
    %v51 = vshrl.u32 %v50, 5
    %v52 = vand.u32 %v50, 31
    %v53 = vsub.s32 32, %v52
    %v54 = vshrl.u32 683565275, %v53
    %v55 = vshll.u32 683565275, %v52
    %v56 = vshrl.u32 2475754826, %v53
    %v57 = vor.u32 %v55, %v56
    %v58 = vshll.u32 2475754826, %v52
    %v59 = vshrl.u32 2131351028, %v53
    %v60 = vor.u32 %v58, %v59
    %v61 = vshll.u32 2131351028, %v52
    %v62 = vshrl.u32 2102212464, %v53
    %v63 = vor.u32 %v61, %v62
    %v64 = vshll.u32 2102212464, %v52
    %v65 = vshrl.u32 920167782, %v53
    %v66 = vor.u32 %v64, %v65
    %v67 = vshll.u32 920167782, %v52
    %v68 = vshrl.u32 1326507024, %v53
    %v69 = vor.u32 %v67, %v68
    %vm70 = vcmp.lt.s32.totalorder %v51, 1
    %vm71 = vcmp.lt.s32.totalorder %v51, 2
    %vm72 = vcmp.lt.s32.totalorder %v51, 3
    %vm73 = vcmp.lt.s32.totalorder %v51, 4
    %v74 = vsel %vm70, %v54, %v57
    %v75 = vsel %vm73, %v63, 2102212464
    %v76 = vsel %vm72, %v60, %v75
    %v77 = vsel %vm71, %v74, %v76
    %v78 = vsel %vm70, %v57, %v60
    %v79 = vsel %vm73, %v66, 920167782
    %v80 = vsel %vm72, %v63, %v79
    %v81 = vsel %vm71, %v78, %v80
    %v82 = vsel %vm70, %v60, %v63
    %v83 = vsel %vm73, %v69, 1326507024
    %v84 = vsel %vm72, %v66, %v83
    %v85 = vsel %vm71, %v82, %v84
    %v86 = vshll.u32 %v46, 8
    %v87 = vand.u32 %v86, 65535
    %v88 = vshrl.u32 %v86, 16
    %v89 = vand.u32 %v85, 65535
    %v90 = vshrl.u32 %v85, 16
    %v91 = vmul.u32 %v87, %v89
    %v92 = vmul.u32 %v87, %v90
    %v93 = vmul.u32 %v88, %v89
    %v94 = vmul.u32 %v88, %v90
    %v95 = vshll.u32 %v92, 16
    %v96 = vshrl.u32 %v92, 16
    %v97 = vshll.u32 %v93, 16
    %v98 = vshrl.u32 %v93, 16
    %vm99 = vc.u32 %v91, %v95
    %v100 = vsel %vm99, 1, 0
    %v101 = vadd.s32 %v91, %v95
    %v102 = vadd.s32 %v94, %v100
    %vm103 = vc.u32 %v101, %v97
    %v104 = vsel %vm103, 1, 0
    %v105 = vadd.s32 %v101, %v97
    %v106 = vadd.s32 %v102, %v104
    %v107 = vadd.s32 %v106, %v96
    %v108 = vadd.s32 %v107, %v98
    %v109 = vand.u32 %v86, 65535
    %v110 = vshrl.u32 %v86, 16
    %v111 = vand.u32 %v81, 65535
    %v112 = vshrl.u32 %v81, 16
    %v113 = vmul.u32 %v109, %v111
    %v114 = vmul.u32 %v109, %v112
    %v115 = vmul.u32 %v110, %v111
    %v116 = vmul.u32 %v110, %v112
    %v117 = vshll.u32 %v114, 16
    %v118 = vshrl.u32 %v114, 16
    %v119 = vshll.u32 %v115, 16
    %v120 = vshrl.u32 %v115, 16
    %vm121 = vc.u32 %v113, %v117
    %v122 = vsel %vm121, 1, 0
    %v123 = vadd.s32 %v113, %v117
    %v124 = vadd.s32 %v116, %v122
    %vm125 = vc.u32 %v123, %v119
    %v126 = vsel %vm125, 1, 0
    %v127 = vadd.s32 %v123, %v119
    %v128 = vadd.s32 %v124, %v126
    %v129 = vadd.s32 %v128, %v118
    %v130 = vadd.s32 %v129, %v120
    %v131 = vmul.u32 %v86, %v77
    %v132 = vadd.s32 %v108, %v127
    %vm133 = vc.u32 %v108, %v127
    %v134 = vadd.s32 %v130, 1
    %v135 = vsel %vm133, %v134, %v130
    %v136 = vadd.s32 %v131, %v135
    %v137 = vadd.s32 %v136, 536870912
    %v138 = vshrl.u32 %v137, 30
    %v139 = vshll.u32 %v138, 30
    %v140 = vsub.s32 %v136, %v139
    %vm141 = vcmp.lt.s32.totalorder %v140, 0
    %v142 = vsub.s32 0, %v140
    %v143 = vsel %vm141, %v142, %v140
    %v144 = vclz %v143
    %v145 = vsub.s32 %v144, 2
    %vm146 = vcmp.gt.s32.totalorder 0, %v145
    %v147 = vsel %vm146, 0, %v145
    %v148 = vsub.s32 32, %v147
    %v149 = vshll.u32 %v140, %v147
    %v150 = vshrl.u32 %v132, %v148
    %v151 = vor.u32 %v149, %v150
    %v152 = vsub.s32 4294967266, %v147
    %v153 = vadd.s32 %v152, 127
    %v154 = vshll.u32 %v153, 23
    %v155 = vor.u32 4788187, %v154
    %v156 = vand.u32 2147483647, %v155
    %v158 = vcvt.s32.f32 %v151
    %v159 = vmul.f32 %v158, %v156
    %v160 = vxor.u32 %v159, 2147483648
    %v161 = vsel %vm40, %v160, %v159
    %v162 = vsub.s32 4, %v138
    %v163 = vsel %vm40, %v162, %v138
    %v164 = vsel %vm39, %v37, %v161
    %v165 = vsel %vm39, 0, %v163
    %v166 = vmul.f32 %v164, %v164
    %v167 = vmul.f32 %v166, -0.001358992
    %v168 = vadd.f32 %v167, 0.041655596
    %v169 = vmul.f32 %v166, %v168
    %v170 = vadd.f32 %v169, -0.4999988
    %v171 = vmul.f32 %v166, %v170
    %v172 = vadd.f32 1.0, %v171
    %v173 = vmul.f32 %v164, %v164
    %v174 = vmul.f32 %v173, -0.00019511016
    %v175 = vadd.f32 %v174, 0.008332121
    %v176 = vmul.f32 %v173, %v175
    %v177 = vadd.f32 %v176, -0.16666654
    %v178 = vmul.f32 %v173, %v177
    %v179 = vadd.f32 %v178, 1.0
    %v180 = vmul.f32 %v179, %v164
    %vm181 = vweird.f32 %v37
    %v182 = vand.u32 %v165, 3
    %vm183 = vcmp.lt.s32.totalorder %v182, 2
    %vm184 = vcmp.eq.s32.totalorder %v182, 0
    %v185 = vxor.u32 %v180, 2147483648
    %v186 = vsel %vm184, %v172, %v185
    %vm187 = vcmp.eq.s32.totalorder %v182, 2
    %v188 = vxor.u32 %v172, 2147483648
    %v189 = vsel %vm187, %v188, %v180
    %v190 = vsel %vm183, %v186, %v189
    %v191 = vsel %vm181, nan, %v190
    %v192 = vld [vmem:[%s2] sm:$0xff]
    %v193 = vld [vmem:[%s2 + $0x8] sm:$0xff]
    %v194 = vld [vmem:[%s2 + $0x10] sm:$0xff]
    %v195 = vld [vmem:[%s2 + $0x18] sm:$0xff]
    %v196 = vld [vmem:[%s2 + $0x20] sm:$0xff]
    %v197 = vld [vmem:[%s2 + $0x28] sm:$0xff]
    %v198 = vld [vmem:[%s2 + $0x30] sm:$0xff]
    %v199 = vld [vmem:[%s2 + $0x38] sm:$0xff]
    %v200 = vld [vmem:[%s2 + $0x40] sm:$0xff]
    %v201 = vld [vmem:[%s2 + $0x48] sm:$0xff]
    %v202 = vld [vmem:[%s2 + $0x50] sm:$0xff]
    %v203 = vld [vmem:[%s2 + $0x58] sm:$0xff]
    %v204 = vld [vmem:[%s2 + $0x60] sm:$0xff]
    %v205 = vld [vmem:[%s2 + $0x68] sm:$0xff]
    %v206 = vld [vmem:[%s2 + $0x70] sm:$0xff]
    %v207 = vld [vmem:[%s2 + $0x78] sm:$0xff]
    %v208 = vand.u32 2147483647, %v37
    %vm209 = vcmp.le.f32.partialorder %v208, 0.7853982
    %vm210 = vcmp.lt.s32.totalorder %v37, 0
    %v211 = vand.u32 %v37, 2139095040
    %v212 = vshrl.u32 %v211, 23
    %v213 = vsub.s32 %v212, 127
    %v214 = vand.u32 2147483647, %v37
    %v215 = vand.u32 %v214, 8388607
    %v216 = vor.u32 %v215, 8388608
    %v217 = vsub.s32 0, %v216
    %v218 = vadd.s32 %v213, 1
    %vm219 = vcmp.gt.s32.totalorder %v218, 0
    %v220 = vsel %vm219, %v218, 0
    %v221 = vshrl.u32 %v220, 5
    %v222 = vand.u32 %v220, 31
    %v223 = vsub.s32 32, %v222
    %v224 = vshrl.u32 683565275, %v223
    %v225 = vshll.u32 683565275, %v222
    %v226 = vshrl.u32 2475754826, %v223
    %v227 = vor.u32 %v225, %v226
    %v228 = vshll.u32 2475754826, %v222
    %v229 = vshrl.u32 2131351028, %v223
    %v230 = vor.u32 %v228, %v229
    %v231 = vshll.u32 2131351028, %v222
    %v232 = vshrl.u32 2102212464, %v223
    %v233 = vor.u32 %v231, %v232
    %v234 = vshll.u32 2102212464, %v222
    %v235 = vshrl.u32 920167782, %v223
    %v236 = vor.u32 %v234, %v235
    %v237 = vshll.u32 920167782, %v222
    %v238 = vshrl.u32 1326507024, %v223
    %v239 = vor.u32 %v237, %v238
    %vm240 = vcmp.lt.s32.totalorder %v221, 1
    %vm241 = vcmp.lt.s32.totalorder %v221, 2
    %vm242 = vcmp.lt.s32.totalorder %v221, 3
    %vm243 = vcmp.lt.s32.totalorder %v221, 4
    %v244 = vsel %vm240, %v224, %v227
    %v245 = vsel %vm243, %v233, 2102212464
    %v246 = vsel %vm242, %v230, %v245
    %v247 = vsel %vm241, %v244, %v246
    %v248 = vsel %vm240, %v227, %v230
    %v249 = vsel %vm243, %v236, 920167782
    %v250 = vsel %vm242, %v233, %v249
    %v251 = vsel %vm241, %v248, %v250
    %v252 = vsel %vm240, %v230, %v233
    %v253 = vsel %vm243, %v239, 1326507024
    %v254 = vsel %vm242, %v236, %v253
    %v255 = vsel %vm241, %v252, %v254
    %v256 = vshll.u32 %v216, 8
    %v257 = vand.u32 %v256, 65535
    %v258 = vshrl.u32 %v256, 16
    %v259 = vand.u32 %v255, 65535
    %v260 = vshrl.u32 %v255, 16
    %v261 = vmul.u32 %v257, %v259
    %v262 = vmul.u32 %v257, %v260
    %v263 = vmul.u32 %v258, %v259
    %v264 = vmul.u32 %v258, %v260
    %v265 = vshll.u32 %v262, 16
    %v266 = vshrl.u32 %v262, 16
    %v267 = vshll.u32 %v263, 16
    %v268 = vshrl.u32 %v263, 16
    %vm269 = vc.u32 %v261, %v265
    %v270 = vsel %vm269, 1, 0
    %v271 = vadd.s32 %v261, %v265
    %v272 = vadd.s32 %v264, %v270
    %vm273 = vc.u32 %v271, %v267
    %v274 = vsel %vm273, 1, 0
    %v275 = vadd.s32 %v271, %v267
    %v276 = vadd.s32 %v272, %v274
    %v277 = vadd.s32 %v276, %v266
    %v278 = vadd.s32 %v277, %v268
    %v279 = vand.u32 %v256, 65535
    %v280 = vshrl.u32 %v256, 16
    %v281 = vand.u32 %v251, 65535
    %v282 = vshrl.u32 %v251, 16
    %v283 = vmul.u32 %v279, %v281
    %v284 = vmul.u32 %v279, %v282
    %v285 = vmul.u32 %v280, %v281
    %v286 = vmul.u32 %v280, %v282
    %v287 = vshll.u32 %v284, 16
    %v288 = vshrl.u32 %v284, 16
    %v289 = vshll.u32 %v285, 16
    %v290 = vshrl.u32 %v285, 16
    %vm291 = vc.u32 %v283, %v287
    %v292 = vsel %vm291, 1, 0
    %v293 = vadd.s32 %v283, %v287
    %v294 = vadd.s32 %v286, %v292
    %vm295 = vc.u32 %v293, %v289
    %v296 = vsel %vm295, 1, 0
    %v297 = vadd.s32 %v293, %v289
    %v298 = vadd.s32 %v294, %v296
    %v299 = vadd.s32 %v298, %v288
    %v300 = vadd.s32 %v299, %v290
    %v301 = vmul.u32 %v256, %v247
    %v302 = vadd.s32 %v278, %v297
    %vm303 = vc.u32 %v278, %v297
    %v304 = vadd.s32 %v300, 1
    %v305 = vsel %vm303, %v304, %v300
    %v306 = vadd.s32 %v301, %v305
    %v307 = vadd.s32 %v306, 536870912
    %v308 = vshrl.u32 %v307, 30
    %v309 = vshll.u32 %v308, 30
    %v310 = vsub.s32 %v306, %v309
    %vm311 = vcmp.lt.s32.totalorder %v310, 0
    %v312 = vsub.s32 0, %v310
    %v313 = vsel %vm311, %v312, %v310
    %v314 = vclz %v313
    %v315 = vsub.s32 %v314, 2
    %vm316 = vcmp.gt.s32.totalorder 0, %v315
    %v317 = vsel %vm316, 0, %v315
    %v318 = vsub.s32 32, %v317
    %v319 = vshll.u32 %v310, %v317
    %v320 = vshrl.u32 %v302, %v318
    %v321 = vor.u32 %v319, %v320
    %v322 = vsub.s32 4294967266, %v317
    %v323 = vadd.s32 %v322, 127
    %v324 = vshll.u32 %v323, 23
    %v325 = vor.u32 4788187, %v324
    %v326 = vand.u32 2147483647, %v325
    %v328 = vcvt.s32.f32 %v321
    %v329 = vmul.f32 %v328, %v326
    %v330 = vxor.u32 %v329, 2147483648
    %v331 = vsel %vm210, %v330, %v329
    %v332 = vsub.s32 4, %v308
    %v333 = vsel %vm210, %v332, %v308
    %v334 = vsel %vm209, %v37, %v331
    %v335 = vsel %vm209, 0, %v333
    %v336 = vmul.f32 %v334, %v334
    %v337 = vmul.f32 %v336, -0.001358992
    %v338 = vadd.f32 %v337, 0.041655596
    %v339 = vmul.f32 %v336, %v338
    %v340 = vadd.f32 %v339, -0.4999988
    %v341 = vmul.f32 %v336, %v340
    %v342 = vadd.f32 1.0, %v341
    %v343 = vmul.f32 %v334, %v334
    %v344 = vmul.f32 %v343, -0.00019511016
    %v345 = vadd.f32 %v344, 0.008332121
    %v346 = vmul.f32 %v343, %v345
    %v347 = vadd.f32 %v346, -0.16666654
    %v348 = vmul.f32 %v343, %v347
    %v349 = vadd.f32 %v348, 1.0
    %v350 = vmul.f32 %v349, %v334
    %vm351 = vweird.f32 %v37
    %v352 = vadd.s32 %v335, 3
    %v353 = vand.u32 %v352, 3
    %vm354 = vcmp.lt.s32.totalorder %v353, 2
    %vm355 = vcmp.eq.s32.totalorder %v353, 0
    %v356 = vxor.u32 %v350, 2147483648
    %v357 = vsel %vm355, %v342, %v356
    %vm358 = vcmp.eq.s32.totalorder %v353, 2
    %v359 = vxor.u32 %v342, 2147483648
    %v360 = vsel %vm358, %v359, %v350
    %v361 = vsel %vm354, %v357, %v360
    %v362 = vsel %vm351, nan, %v361
    %v363 = vld [vmem:[%s3] sm:$0xff]
    %v364 = vld [vmem:[%s3 + $0x8] sm:$0xff]
    %v365 = vld [vmem:[%s3 + $0x10] sm:$0xff]
    %v366 = vld [vmem:[%s3 + $0x18] sm:$0xff]
    %v367 = vld [vmem:[%s3 + $0x20] sm:$0xff]
    %v368 = vld [vmem:[%s3 + $0x28] sm:$0xff]
    %v369 = vld [vmem:[%s3 + $0x30] sm:$0xff]
    %v370 = vld [vmem:[%s3 + $0x38] sm:$0xff]
    %v371 = vld [vmem:[%s3 + $0x40] sm:$0xff]
    %v372 = vld [vmem:[%s3 + $0x48] sm:$0xff]
    %v373 = vld [vmem:[%s3 + $0x50] sm:$0xff]
    %v374 = vld [vmem:[%s3 + $0x58] sm:$0xff]
    %v375 = vld [vmem:[%s3 + $0x60] sm:$0xff]
    %v376 = vld [vmem:[%s3 + $0x68] sm:$0xff]
    %v377 = vld [vmem:[%s3 + $0x70] sm:$0xff]
    %v378 = vld [vmem:[%s3 + $0x78] sm:$0xff]
    %379 = vmatpush.msra.mxu0 %v378
    %380 = vmatpush.msra.mxu0 %v377
    %381 = vmatpush.msra.mxu0 %v376
    %382 = vmatpush.msra.mxu0 %v375
    %383 = vmatpush.msra.mxu0 %v374
    %384 = vmatpush.msra.mxu0 %v373
    %385 = vmatpush.msra.mxu0 %v372
    %386 = vmatpush.msra.mxu0 %v371
    %387 = vmatpush.msra.mxu0 %v370
    %388 = vmatpush.msra.mxu0 %v369
    %389 = vmatpush.msra.mxu0 %v368
    %390 = vmatpush.msra.mxu0 %v367
    %391 = vmatpush.msra.mxu0 %v366
    %392 = vmatpush.msra.mxu0 %v365
    %393 = vmatpush.msra.mxu0 %v364
    %394 = vmatpush.msra.mxu0 %v363
    %395 = vmatmul.f32.gmra.mxu0 %v362
    %v396 = vpop.f32.mrf.mxu0
    %v397 = vadd.f32 0.0, %v396
    %398 = vdwg.mxu0
    %399 = vmatpush.msra.mxu0 %v207
    %400 = vmatpush.msra.mxu0 %v206
    %401 = vmatpush.msra.mxu0 %v205
    %402 = vmatpush.msra.mxu0 %v204
    %403 = vmatpush.msra.mxu0 %v203
    %404 = vmatpush.msra.mxu0 %v202
    %405 = vmatpush.msra.mxu0 %v201
    %406 = vmatpush.msra.mxu0 %v200
    %407 = vmatpush.msra.mxu0 %v199
    %408 = vmatpush.msra.mxu0 %v198
    %409 = vmatpush.msra.mxu0 %v197
    %410 = vmatpush.msra.mxu0 %v196
    %411 = vmatpush.msra.mxu0 %v195
    %412 = vmatpush.msra.mxu0 %v194
    %413 = vmatpush.msra.mxu0 %v193
    %414 = vmatpush.msra.mxu0 %v192
    %415 = vmatmul.f32.gmra.mxu0 %v191
    %v416 = vpop.f32.mrf.mxu0
    %v417 = vadd.f32 %v397, %v416
    %418 = vdwg.mxu0
    %v419 = vld [vmem:[%s4] sm:$0x1]
    %v421 = vperm.slane %v419, 0
    %v423 = vadd.f32 %v417, %v421
    %v424 = vxor.u32 %v423, 2147483648
    %v425 = vmul.f32 %v424, 1.442695
    %v426 = vpow.pop %v425
    %v427 = vadd.f32 %v426, 1.0
    %v428 = vrcp.pop %v427
    %v429 = vmul.f32 %v427, %v428
    %v430 = vsub.f32 1.0, %v429
    %v431 = vmul.f32 %v428, %v430
    %v432 = vadd.f32 %v428, %v431
    %vm433 = vweird.f32 %v427
    %vm434 = vweird.f32 %v428
    %vm435 = vmor %vm433, %vm434
    %v436 = vsel %vm435, %v428, %v432
    %v437 = vand.u32 2147483647, %v427
    %vm438 = vcmp.eq.f32.partialorder %v437, 8.507059e+37
    %v439 = vand.u32 %v427, 2147483648
    %v440 = vor.u32 1.1754944e-38, %v439
    %v441 = vsel %vm438, %v440, %v436
    %v442 = vmul.f32 1.0, %v441
    %v443 = vmul.f32 %v423, %v442
    %v444 = vld [vmem:[%s5] sm:$0xff]
    %v445 = vld [vmem:[%s5 + $0x8] sm:$0xff]
    %v446 = vld [vmem:[%s5 + $0x10] sm:$0xff]
    %v447 = vld [vmem:[%s5 + $0x18] sm:$0xff]
    %v448 = vld [vmem:[%s6] sm:$0x1]
    %v450 = vperm.slane %v448, 0
    %vm452 = vcmask 261120
    %v454 = vsel %vm452, %v443, 0
    %456 = vmatpush.msra.mxu0 0.0
    %457 = vmatpush.msra.mxu0 0.0
    %458 = vmatpush.msra.mxu0 0.0
    %459 = vmatpush.msra.mxu0 0.0
    %460 = vmatpush.msra.mxu0 0.0
    %461 = vmatpush.msra.mxu0 0.0
    %462 = vmatpush.msra.mxu0 0.0
    %463 = vmatpush.msra.mxu0 0.0
    %464 = vmatpush.msra.mxu0 0.0
    %465 = vmatpush.msra.mxu0 0.0
    %466 = vmatpush.msra.mxu0 0.0
    %467 = vmatpush.msra.mxu0 0.0
    %468 = vmatpush.msra.mxu0 %v447
    %469 = vmatpush.msra.mxu0 %v446
    %470 = vmatpush.msra.mxu0 %v445
    %471 = vmatpush.msra.mxu0 %v444
    %472 = vmatmul.f32.gmra.mxu0 %v454
    %v473 = vpop.f32.mrf.mxu0
    %v474 = vadd.f32 %v450, %v473
    %475 = vdwg.mxu0
    %476 = vst.msk [vmem:[#allocation2] sm:$0xff] %vm452, %v474
    // Predicated region
    $region30: #{tpu_custom_call.1} parent=1 // pred_check
      _
    $region31: #{tpu_custom_call.1} parent=1 // pred_check_branch
      %478 = sbr.rel (0) target = $region33
    $region32: #{tpu_custom_call.1} parent=1 // pred_region
      %480 = vsyncadd [#allocation3], 0
      %s482 = sshll.u32 [#allocation2], 4
      %s483 = int_to_ptr.vmem [resolvable:$true] %s482
      %s484 = sshll.u32 %s7, 4
      %s485 = int_to_ptr.hbm [resolvable:$true] %s484
      %487 = dma.vmem_to_hbm [thread:$0]  %s483, 128, %s485, [#allocation3]
    $region33: #{tpu_custom_call.1} parent=1 // pred_fallthru
      _
    // Predicated region
    $region34: #{tpu_custom_call.1} parent=1 // pred_check
      _
    $region35: #{tpu_custom_call.1} parent=1 // pred_check_branch
      %489 = sbr.rel (0) target = $region37
    $region36: #{tpu_custom_call.1} parent=1 // pred_region
      %491 = dma.done [#allocation3], 128
    $region37: #{tpu_custom_call.1} parent=1 // pred_fallthru
      _
    %492 = vsyncpa [#allocation3], 1

</llo_original>
